<compile_context>
chip_gen: v6e
topology: v6e:2x2x1
jax: 0.10.0
libtpu: 0.0.40
codegen_flags: <defaults>
</compile_context>

<pallas_src>
import functools

import jax
import jax.numpy as jnp
import numpy as np
from jax.experimental import pallas as pl
from jax.experimental.pallas import tpu as pltpu


def _round_up(x, m):
    return ((x + m - 1) // m) * m


def _pick_row_tile(rows, max_tile=2048):
    """Row tile for the (rows-within-timestep) parallel grid axis."""
    tr = min(max_tile, _round_up(rows, 8))
    # Guarantee >=2 row tiles when rows allow (v7x megacore sharding) while
    # keeping tiles >=256 rows so v5e/v6e are not grid-overhead dominated.
    if rows >= 512:
        tr = min(tr, _round_up((rows + 1) // 2, 8))
    return max(8, tr)


# ----------------------------------------------------------------------------
# Fused kernel: im2col GEMM (+bias) -> gate activations -> fo-pooling step
# ----------------------------------------------------------------------------
def _qrnn_fused_kernel(a_ref, w_ref, o_ref, h_ref, *, act):
    # a_ref: (tr, Kpad) bf16 im2col rows for this (row-tile, timestep)
    # w_ref: (Kpad, 2*hidp) bf16 weights; Z cols [0,hidp), F cols [hidp,2*hidp)
    # o_ref: (tr, hid) f32 hidden-state output for this (row-tile, timestep)
    # h_ref: (tr, hidp) f32 carried hidden state (VMEM scratch)
    t = pl.program_id(1)                      # time axis (inner, "arbitrary")
    hidp = h_ref.shape[-1]
    hid = o_ref.shape[-1]

    acc = jnp.dot(a_ref[...], w_ref[...],
                  preferred_element_type=jnp.float32)     # (tr, 2*hidp) f32

    zpre = acc[:, :hidp]                      # lane-block aligned static slices
    fpre = acc[:, hidp:]
    if act == "tanh":
        z = jnp.tanh(zpre)
    elif act == "relu":
        z = jnp.maximum(zpre, 0.0)
    elif act == "none":
        z = zpre
    else:
        raise NotImplementedError(act)
    # sigmoid(x) == 0.5 * tanh(0.5 * x) + 0.5 : single EUP push + VPU mul/add
    f = 0.5 * jnp.tanh(0.5 * fpre) + 0.5

    @pl.when(t == 0)
    def _():
        h_ref[...] = jnp.zeros_like(h_ref)    # h is None on the first step

    h_ref[...] = f * h_ref[...] + (1.0 - f) * z
    o_ref[...] = h_ref[:, :hid]


def qrnn_fused_conv_scan(A, Wm, *, hid, act, tr, reverse):
    """A: (D, rows_pad, Kpad) bf16 time-major im2col rows (bias ones-column
    folded in); Wm: (Kpad, 2*hidp) bf16.  Returns H: (D, rows_pad, hid) f32."""
    D, rows_pad, Kpad = A.shape
    Np = Wm.shape[1]
    hidp = Np // 2
    assert rows_pad % tr == 0

    if reverse:
        imap = lambda r, t: (D - 1 - t, r, 0)
    else:
        imap = lambda r, t: (t, r, 0)

    return pl.pallas_call(
        functools.partial(_qrnn_fused_kernel, act=act),
        out_shape=jax.ShapeDtypeStruct((D, rows_pad, hid), jnp.float32),
        grid_spec=pltpu.PrefetchScalarGridSpec(
            num_scalar_prefetch=0,
            grid=(rows_pad // tr, D),
            in_specs=[
                pl.BlockSpec((None, tr, Kpad), imap),          # A (squeezed D)
                pl.BlockSpec((Kpad, Np), lambda r, t: (0, 0)),  # W, resident
            ],
            out_specs=pl.BlockSpec((None, tr, hid), imap),
            scratch_shapes=[pltpu.VMEM((tr, hidp), jnp.float32)],
        ),
        compiler_params=pltpu.CompilerParams(
            # rows are independent -> parallel (shards across v7x's 2 TCs);
            # time carries the hidden state in scratch -> arbitrary (inner).
            dimension_semantics=("parallel", "arbitrary")),
    )(A, Wm)


# ----------------------------------------------------------------------------
# QRNN3DLayer wrapper (im2col / final transpose glue in plain JAX, under jit)
# ----------------------------------------------------------------------------
class QRNN3DLayerPallas:
    """QRNN3DLayer with conv_layer = Conv3d(in, 2*hidden, k=3, pad=1)."""

    def __init__(self, in_channels, hidden_channels, key, act="tanh"):
        self.in_channels = in_channels
        self.hidden = hidden_channels
        self.act = act
        kw, kb = jax.random.split(key)
        fan_in = in_channels * 3 * 3 * 3
        scale = 1.0 / np.sqrt(fan_in)
        # Conv3d weight layout (O, I, kD, kH, kW), like PyTorch.
        self.weight = jax.random.uniform(
            kw, (2 * hidden_channels, in_channels, 3, 3, 3),
            jnp.float32, -scale, scale)
        self.bias = jax.random.uniform(
            kb, (2 * hidden_channels,), jnp.float32, -scale, scale)

    def __call__(self, x, reverse=False):
        B, C, D, H, W = x.shape
        hid = self.hidden
        hidp = _round_up(hid, 128)            # per-gate 128-lane padding
        rows = B * H * W
        tr = _pick_row_tile(rows)
        rows_pad = _round_up(rows, tr)

        # --- im2col (3x3x3, pad 1, stride 1), time-major rows, bf16 ---
        xb = x.astype(jnp.bfloat16)
        xp = jnp.pad(xb, ((0, 0), (0, 0), (1, 1), (1, 1), (1, 1)))
        xt = xp.transpose(2, 0, 3, 4, 1)      # (D+2, B, H+2, W+2, C)
        taps = []
        for kd in range(3):
            for kh in range(3):
                for kw_ in range(3):
                    taps.append(xt[kd:kd + D, :, kh:kh + H, kw_:kw_ + W, :])
        patches = jnp.stack(taps, axis=-1)    # (D, B, H, W, C, 27)
        A = patches.reshape(D, rows, C * 27)

        K = C * 27 + 1                        # +1 for the bias ones-column
        Kpad = _round_up(K, 128)
        ones = jnp.ones((D, rows, 1), jnp.bfloat16)
        A = jnp.concatenate([A, ones], axis=2)
        A = jnp.pad(A, ((0, 0), (0, rows_pad - rows), (0, Kpad - K)))

        # --- weight packing: Z -> cols [0,hid), F -> cols [hidp, hidp+hid) ---
        Wz = self.weight[:hid].reshape(hid, C * 27).T          # (C*27, hid)
        Wf = self.weight[hid:].reshape(hid, C * 27).T
        Wz = jnp.concatenate([Wz, self.bias[:hid][None, :]], axis=0)   # (K, hid)
        Wf = jnp.concatenate([Wf, self.bias[hid:][None, :]], axis=0)
        Wz = jnp.pad(Wz, ((0, Kpad - K), (0, hidp - hid)))
        Wf = jnp.pad(Wf, ((0, Kpad - K), (0, hidp - hid)))
        Wm = jnp.concatenate([Wz, Wf], axis=1).astype(jnp.bfloat16)    # (Kpad, 2*hidp)

        # --- fused conv-gate GEMM + activations + fo-pooling recurrence ---
        Hout = qrnn_fused_conv_scan(A, Wm, hid=hid, act=self.act,
                                    tr=tr, reverse=reverse)    # (D, rows_pad, hid)

        Hf = Hout[:, :rows, :].reshape(D, B, H, W, hid)
        return Hf.transpose(1, 4, 0, 2, 3)                     # (B, hid, D, H, W)


# ----------------------------------------------------------------------------
# Pure-JAX reference (mirrors the PyTorch forward semantics exactly, f32)
# ----------------------------------------------------------------------------
def reference_forward(x, weight, bias, hidden, reverse=False):
    gates = jax.lax.conv_general_dilated(
        x, weight, window_strides=(1, 1, 1), padding=((1, 1),) * 3,
        dimension_numbers=("NCDHW", "OIDHW", "NCDHW"))
    gates = gates + bias[None, :, None, None, None]
    Z = jnp.tanh(gates[:, :hidden])
    F = jax.nn.sigmoid(gates[:, hidden:])
    D = x.shape[2]
    hs, h = [], None
    times = range(D) if not reverse else range(D - 1, -1, -1)
    for t in times:
        z, f = Z[:, :, t], F[:, :, t]
        h = (1 - f) * z if h is None else f * h + (1 - f) * z
        if not reverse:
            hs.append(h)
        else:
            hs.insert(0, h)
    return jnp.stack(hs, axis=2)


if __name__ == "__main__":
    key = jax.random.PRNGKey(0)
    k_x, k_p = jax.random.split(key)

    B, C, D, H, W = 2, 4, 8, 16, 16
    hidden = 32
    x = jax.random.normal(k_x, (B, C, D, H, W), jnp.float32)

    layer = QRNN3DLayerPallas(C, hidden, k_p, act="tanh")

    fwd_fn = jax.jit(lambda inp: layer(inp, reverse=False))
    rev_fn = jax.jit(lambda inp: layer(inp, reverse=True))
    out_fwd = jax.block_until_ready(fwd_fn(x))
    out_rev = jax.block_until_ready(rev_fn(x))
    assert out_fwd.shape == (B, hidden, D, H, W)
    assert out_rev.shape == (B, hidden, D, H, W)

    # Tight check: f32 reference evaluated at the bf16-rounded inputs/weights
    # (the kernel's MXU path uses bf16 operands with f32 accumulation; the
    # recurrence itself runs in f32 in VMEM scratch).
    xq = x.astype(jnp.bfloat16).astype(jnp.float32)
    wq = layer.weight.astype(jnp.bfloat16).astype(jnp.float32)
    bq = layer.bias.astype(jnp.bfloat16).astype(jnp.float32)
    ref_fwd_q = reference_forward(xq, wq, bq, hidden, reverse=False)
    ref_rev_q = reference_forward(xq, wq, bq, hidden, reverse=True)
    np.testing.assert_allclose(np.asarray(out_fwd), np.asarray(ref_fwd_q),
                               rtol=5e-3, atol=5e-3)
    np.testing.assert_allclose(np.asarray(out_rev), np.asarray(ref_rev_q),
                               rtol=5e-3, atol=5e-3)

    # Loose sanity check against the full-f32 reference (bf16 GEMM inputs
    # compound a small error over the D-step recurrence).
    ref_fwd = reference_forward(x, layer.weight, layer.bias, hidden, reverse=False)
    ref_rev = reference_forward(x, layer.weight, layer.bias, hidden, reverse=True)
    np.testing.assert_allclose(np.asarray(out_fwd), np.asarray(ref_fwd),
                               rtol=1e-1, atol=1e-1)
    np.testing.assert_allclose(np.asarray(out_rev), np.asarray(ref_rev),
                               rtol=1e-1, atol=1e-1)

    print("KERNEL_OK")
</pallas_src>

<mosaic_0001>
module attributes {stable_mosaic.version = 11 : i64} {
  func.func @_qrnn_fused_kernel(%arg0: i32, %arg1: i32, %arg2: memref<1x256x128xbf16, #tpu.memory_space<vmem>>, %arg3: memref<128x256xbf16, #tpu.memory_space<vmem>>, %arg4: memref<1x256x32xf32, #tpu.memory_space<vmem>>, %arg5: memref<256x128xf32, #tpu.memory_space<vmem>>) attributes {dimension_semantics = [#tpu.dimension_semantics<parallel>, #tpu.dimension_semantics<arbitrary>], iteration_bounds = array<i64: 2, 8>, scalar_prefetch = 0 : i64, scratch_operands = 1 : i64, tpu.core_type = #tpu.core_type<tc>, window_params = [{transform_indices = @transform_0, window_bounds = array<i64: 1, 256, 128>}, {pipeline_mode = #tpu.pipeline_mode<synchronous>, transform_indices = @transform_1, window_bounds = array<i64: 128, 256>}, {transform_indices = @transform_2, window_bounds = array<i64: 1, 256, 32>}]} {
    %c0 = arith.constant 0 : index
    %c0_0 = arith.constant 0 : index
    %c0_1 = arith.constant 0 : index
    %0 = vector.load %arg2[%c0, %c0_0, %c0_1] : memref<1x256x128xbf16, #tpu.memory_space<vmem>>, vector<1x256x128xbf16>
    %1 = vector.shape_cast %0 : vector<1x256x128xbf16> to vector<256x128xbf16>
    %c0_2 = arith.constant 0 : index
    %c0_3 = arith.constant 0 : index
    %2 = vector.load %arg3[%c0_2, %c0_3] : memref<128x256xbf16, #tpu.memory_space<vmem>>, vector<128x256xbf16>
    %cst = arith.constant dense<0.000000e+00> : vector<256x256xf32>
    %3 = tpu.matmul %1, %2, %cst {dimension_numbers = #tpu.dot_dimension_numbers<[1], [0], [0], [1], [0, 0, 1, 1], [], []>} : vector<256x128xbf16>, vector<128x256xbf16>, vector<256x256xf32> -> vector<256x256xf32>
    %4 = vector.extract_strided_slice %3 {offsets = [0, 0], sizes = [256, 128], strides = [1, 1]} : vector<256x256xf32> to vector<256x128xf32>
    %5 = vector.extract_strided_slice %3 {offsets = [0, 128], sizes = [256, 128], strides = [1, 1]} : vector<256x256xf32> to vector<256x128xf32>
    %6 = math.tanh %4 : vector<256x128xf32>
    %cst_4 = arith.constant 5.000000e-01 : f32
    %7 = vector.broadcast %cst_4 : f32 to vector<256x128xf32>
    %8 = arith.mulf %7, %5 : vector<256x128xf32>
    %9 = math.tanh %8 : vector<256x128xf32>
    %cst_5 = arith.constant 5.000000e-01 : f32
    %10 = vector.broadcast %cst_5 : f32 to vector<256x128xf32>
    %11 = arith.mulf %10, %9 : vector<256x128xf32>
    %cst_6 = arith.constant 5.000000e-01 : f32
    %12 = vector.broadcast %cst_6 : f32 to vector<256x128xf32>
    %13 = arith.addf %11, %12 : vector<256x128xf32>
    %c0_i32 = arith.constant 0 : i32
    %14 = arith.cmpi eq, %arg1, %c0_i32 : i32
    %15 = arith.extui %14 : i1 to i32
    %c0_i32_7 = arith.constant 0 : i32
    %16 = arith.cmpi ne, %15, %c0_i32_7 : i32
    scf.if %16 {
      %cst_18 = arith.constant 0.000000e+00 : f32
      %28 = vector.broadcast %cst_18 : f32 to vector<256x128xf32>
      %c0_19 = arith.constant 0 : index
      %c0_20 = arith.constant 0 : index
      %29 = vector.load %arg5[%c0_19, %c0_20] : memref<256x128xf32, #tpu.memory_space<vmem>>, vector<256x128xf32>
      tpu.vector_store %arg5[%c0_19, %c0_20], %28 {strides = array<i32>} : memref<256x128xf32, #tpu.memory_space<vmem>>, vector<256x128xf32>,
    } else {
    }
    %c0_8 = arith.constant 0 : index
    %c0_9 = arith.constant 0 : index
    %17 = vector.load %arg5[%c0_8, %c0_9] : memref<256x128xf32, #tpu.memory_space<vmem>>, vector<256x128xf32>
    %18 = arith.mulf %13, %17 : vector<256x128xf32>
    %cst_10 = arith.constant 1.000000e+00 : f32
    %19 = vector.broadcast %cst_10 : f32 to vector<256x128xf32>
    %20 = arith.subf %19, %13 : vector<256x128xf32>
    %21 = arith.mulf %20, %6 : vector<256x128xf32>
    %22 = arith.addf %18, %21 : vector<256x128xf32>
    %c0_11 = arith.constant 0 : index
    %c0_12 = arith.constant 0 : index
    %23 = vector.load %arg5[%c0_11, %c0_12] : memref<256x128xf32, #tpu.memory_space<vmem>>, vector<256x128xf32>
    tpu.vector_store %arg5[%c0_11, %c0_12], %22 {strides = array<i32>} : memref<256x128xf32, #tpu.memory_space<vmem>>, vector<256x128xf32>,
    %c0_13 = arith.constant 0 : index
    %c0_14 = arith.constant 0 : index
    %24 = vector.load %arg5[%c0_13, %c0_14] : memref<256x128xf32, #tpu.memory_space<vmem>>, vector<256x32xf32>
    %c0_15 = arith.constant 0 : index
    %c0_16 = arith.constant 0 : index
    %c0_17 = arith.constant 0 : index
    %25 = vector.load %arg4[%c0_15, %c0_16, %c0_17] : memref<1x256x32xf32, #tpu.memory_space<vmem>>, vector<1x256x32xf32>
    %26 = vector.shape_cast %25 : vector<1x256x32xf32> to vector<256x32xf32>
    %27 = vector.shape_cast %24 : vector<256x32xf32> to vector<1x256x32xf32>
    tpu.vector_store %arg4[%c0_15, %c0_16, %c0_17], %27 {strides = array<i32>} : memref<1x256x32xf32, #tpu.memory_space<vmem>>, vector<1x256x32xf32>,
    return
  }
  func.func @transform_0(%arg0: i32, %arg1: i32) -> (i32, i32, i32) {
    %c0_i32 = arith.constant 0 : i32
    %c0_i32_0 = arith.constant 0 : i32
    return %arg1, %arg0, %c0_i32 : i32, i32, i32
  }
  func.func @transform_1(%arg0: i32, %arg1: i32) -> (i32, i32) {
    %c0_i32 = arith.constant 0 : i32
    %c0_i32_0 = arith.constant 0 : i32
    %c0_i32_1 = arith.constant 0 : i32
    return %c0_i32, %c0_i32_0 : i32, i32
  }
  func.func @transform_2(%arg0: i32, %arg1: i32) -> (i32, i32, i32) {
    %c0_i32 = arith.constant 0 : i32
    %c0_i32_0 = arith.constant 0 : i32
    return %arg1, %arg0, %c0_i32 : i32, i32, i32
  }
}

</mosaic_0001>

<llo_original>
// kernel: _lambda_.1
$region0: #{_lambda_.1}
  #allocation0 [shape = 'u32[]', space=smem, size = 0x4, offset = 0x4, fixed_abs, tag = 'smem constant byte address 0x4 - core index']
  #allocation1 [shape = 'u32[144,128]{1,0:T(1,128)}', space=vmem, size = 0x12000, scoped, tag = 'internal scratch']
  #allocation2 [shape = 'f32[256,128]{1,0:T(8,128)}', space=vmem, size = 0x20000, scoped, tag = 'scratch operand']
  %s0 = inlined_call_operand.vmem [shape: bf16[8,512,128], index: 0, kind: input, shape index: {}]
  %s1 = inlined_call_operand.vmem [shape: bf16[128,256], index: 1, kind: input, shape index: {}]
  %s2 = inlined_call_operand.vmem [shape: f32[8,512,32], index: 2, kind: output, shape index: {}]
  %s3 = sld [smem:[#allocation0]]
  $region45: #{_lambda_.1} parent=0
    _
  %s5 = ssub.s32 1, %s3
  %s6 = scalar_select 0, %s5, %s3
  loop: start=0, step=1, limit=18
  $region2: #{_lambda_.1} parent=0 // loop_pre_header
    _
  $region3: #{_lambda_.1} parent=0 // loop_header
    %s8 = sphi 0, %s12
    %p9 = scmp.ge.s32.totalorder %s8, 18
    %s15 = sphi 0, %s27
    %s16 = sphi 0, %s23
    %s17 = sphi 0, %s15
    %s18 = sphi 0, %s16
    %s19 = sphi 0, %s17
    %s20 = sphi 0, %s18
    %s32 = sphi 0, %s34
    %s35 = sphi 0, %s32
    %s36 = sphi 0, %s35
    %s52 = sphi 0, %s36
    %s56 = sphi 0, %s56
    %s58 = sphi 0, %s56
    %s59 = sphi 0, %s58
    %s73 = sphi 0, %s59
    %s81 = sphi 0, %s83
    %s84 = sphi 0, %s81
    %s85 = sphi 0, %s84
    %s101 = sphi 0, %s85
  $region4: #{_lambda_.1} parent=0 // loop_header_branch
    %11 = sbr.rel (%p9) target = $region8
  $region5: #{_lambda_.1} parent=0 // loop_body
    %s13 = ssub.s32 %s8, 1
    %s14 = ssub.s32 %s8, 2
    %s21 = sadd.s32 1, %s16
    %p22 = scmp.ge.s32.totalorder %s21, 8
    %s23 = scalar_select %p22, 0, %s21
    %s24 = sadd.s32 1, %s15
    %s25 = scalar_select %p22, %s24, %s15
    %p26 = scmp.ge.s32.totalorder %s25, 2
    %s27 = scalar_select %p26, 0, %s25
    %s28 = ssub.s32 %s16, %s23
    %s29 = ssub.s32 %s15, %s27
    %s30 = sor.u32 %s28, %s29
    %p31 = scmp.eq.s32.totalorder %s30, 0
    %s33 = sadd.s32 %s32, 1
    %s34 = scalar_select %p31, %s32, %s33
    %p37 = pneg %p31
    %p38 = scmp.eq.s32.totalorder %s8, 15
    %p39 = por %p37, %p38
    %p40 = scmp.ne.s32.totalorder %s32, %s35
    %p41 = scmp.eq.s32.totalorder %s8, 0
    %p42 = por %p40, %p41
    %p43 = scmp.ne.s32.totalorder %s32, %s35
    %p44 = scmp.eq.s32.totalorder %s13, 15
    %p45 = por %p43, %p44
    %p46 = scmp.ne.s32.totalorder %s35, %s36
    %p47 = scmp.eq.s32.totalorder %s13, 0
    %p48 = por %p46, %p47
    %p49 = scmp.ne.s32.totalorder %s35, %s36
    %p50 = scmp.eq.s32.totalorder %s14, 15
    %p51 = por %p49, %p50
    %p53 = scmp.ne.s32.totalorder %s36, %s52
    %p54 = scmp.eq.s32.totalorder %s14, 0
    %p55 = por %p53, %p54
    %s57 = sadd.s32 %s56, 1
    %p60 = scmp.eq.s32.totalorder %s8, 15
    %p61 = scmp.ne.s32.totalorder %s56, %s58
    %p62 = scmp.eq.s32.totalorder %s8, 0
    %p63 = por %p61, %p62
    %p64 = scmp.ne.s32.totalorder %s56, %s58
    %p65 = scmp.eq.s32.totalorder %s13, 15
    %p66 = por %p64, %p65
    %p67 = scmp.ne.s32.totalorder %s58, %s59
    %p68 = scmp.eq.s32.totalorder %s13, 0
    %p69 = por %p67, %p68
    %p70 = scmp.ne.s32.totalorder %s58, %s59
    %p71 = scmp.eq.s32.totalorder %s14, 15
    %p72 = por %p70, %p71
    %p74 = scmp.ne.s32.totalorder %s59, %s73
    %p75 = scmp.eq.s32.totalorder %s14, 0
    %p76 = por %p74, %p75
    %s77 = ssub.s32 %s16, %s23
    %s78 = ssub.s32 %s15, %s27
    %s79 = sor.u32 %s77, %s78
    %p80 = scmp.eq.s32.totalorder %s79, 0
    %s82 = sadd.s32 %s81, 1
    %s83 = scalar_select %p80, %s81, %s82
    %p86 = pneg %p80
    %p87 = scmp.eq.s32.totalorder %s8, 15
    %p88 = por %p86, %p87
    %p89 = scmp.ne.s32.totalorder %s81, %s84
    %p90 = scmp.eq.s32.totalorder %s8, 0
    %p91 = por %p89, %p90
    %p92 = scmp.ne.s32.totalorder %s81, %s84
    %p93 = scmp.eq.s32.totalorder %s13, 15
    %p94 = por %p92, %p93
    %p95 = scmp.ne.s32.totalorder %s84, %s85
    %p96 = scmp.eq.s32.totalorder %s13, 0
    %p97 = por %p95, %p96
    %p98 = scmp.ne.s32.totalorder %s84, %s85
    %p99 = scmp.eq.s32.totalorder %s14, 15
    %p100 = por %p98, %p99
    %p102 = scmp.ne.s32.totalorder %s85, %s101
    %p103 = scmp.eq.s32.totalorder %s14, 0
    %p104 = por %p102, %p103
    %p105 = scmp.le.s32.totalorder 1, %s8
    %p106 = scmp.lt.s32.totalorder %s8, 17
    %p107 = pnand %p105, %p106
    %p108 = pneg %p107
    // Predicated region
    $region9: #{_lambda_.1} parent=5 // pred_check
      _
    $region10: #{_lambda_.1} parent=5 // pred_check_branch
      %110 = sbr.rel (%p107) target = $region12
    $region11: #{_lambda_.1} parent=5 // pred_region
      %s111 = ssub.s32 %s8, 1
      // Predicated region
      $region13: #{_lambda_.1} parent=11 // pred_check
        %p112 = pneg %p69
      $region14: #{_lambda_.1} parent=11 // pred_check_branch
        %114 = sbr.rel (%p112) target = $region16
      $region15: #{_lambda_.1} parent=11 // pred_region
        _
      $region16: #{_lambda_.1} parent=11 // pred_fallthru
        _
    $region12: #{_lambda_.1} parent=5 // pred_fallthru
      _
    %p115 = scmp.lt.s32.totalorder %s8, 16
    // Predicated region
    $region17: #{_lambda_.1} parent=5 // pred_check
      %p116 = pneg %p115
    $region18: #{_lambda_.1} parent=5 // pred_check_branch
      %118 = sbr.rel (%p116) target = $region20
    $region19: #{_lambda_.1} parent=5 // pred_region
      // Predicated region
      $region21: #{_lambda_.1} parent=19 // pred_check
        %p119 = pneg %p42
      $region22: #{_lambda_.1} parent=19 // pred_check_branch
        %121 = sbr.rel (%p119) target = $region24
      $region23: #{_lambda_.1} parent=19 // pred_region
        %s122 = smul.u32 32, %s15
        %p123 = scmp.lt.s32.totalorder %s16, 7
        %s124 = scalar_select %p123, %s16, 7
        %p125 = scmp.lt.s32.totalorder %s122, 63
        %s126 = scalar_select %p125, %s122, 63
        %s127 = smul.addr %s124, 64
        %s128 = sadd.s32 %s126, %s127
        %s129 = smul.addr %s128, 4
        %s130 = scalar_lea.vmem %s0, %s129
        %s131 = smul.u32 32, %s15
      $region24: #{_lambda_.1} parent=19 // pred_fallthru
        _
    $region20: #{_lambda_.1} parent=5 // pred_fallthru
      _
    %p132 = scmp.le.s32.totalorder 1, %s8
    %p133 = scmp.lt.s32.totalorder %s8, 17
    %p134 = pnand %p132, %p133
    %p135 = pneg %p134
    // Predicated region
    $region25: #{_lambda_.1} parent=5 // pred_check
      _
    $region26: #{_lambda_.1} parent=5 // pred_check_branch
      %137 = sbr.rel (%p134) target = $region28
    $region27: #{_lambda_.1} parent=5 // pred_region
      %s138 = ssub.s32 %s8, 1
      %s139 = smul.u32 32, %s17
      %p140 = scmp.lt.s32.totalorder %s18, 7
      %s141 = scalar_select %p140, %s18, 7
      %p142 = scmp.lt.s32.totalorder %s139, 63
      %s143 = scalar_select %p142, %s139, 63
      %s144 = smul.addr %s141, 64
      %s145 = sadd.s32 %s143, %s144
      %s146 = smul.addr %s145, 4
      %s147 = scalar_lea.vmem %s0, %s146
      %p148 = pneg %p48
      %p149 = pneg %p45
      %p150 = pneg %p69
      %p151 = pneg %p66
      %p152 = pneg %p97
      %p153 = pneg %p94
      %s154 = smul.u32 32, %s17
      %p155 = scmp.lt.s32.totalorder %s18, 7
      %s156 = scalar_select %p155, %s18, 7
      %p157 = scmp.lt.s32.totalorder %s154, 63
      %s158 = scalar_select %p157, %s154, 63
      %s159 = smul.addr %s156, 64
      %s160 = sadd.s32 %s158, %s159
      %s161 = smul.addr %s160, 8
      %s162 = scalar_lea.vmem %s2, %s161
      %s163 = smul.u32 32, %s17
      %p164 = scmp.lt.s32.totalorder %s18, 7
      %s165 = scalar_select %p164, %s18, 7
      %p166 = scmp.lt.s32.totalorder %s163, 63
      %s167 = scalar_select %p166, %s163, 63
      %s168 = smul.addr %s165, 64
      %s169 = sadd.s32 %s167, %s168
      %s170 = smul.addr %s169, 4
      %s171 = scalar_lea.vmem %s0, %s170
      %s172 = smul.u32 32, %s17
      %s173 = smul.u32 32, %s17
      %p174 = scmp.lt.s32.totalorder %s18, 7
      %s175 = scalar_select %p174, %s18, 7
      %p176 = scmp.lt.s32.totalorder %s173, 63
      %s177 = scalar_select %p176, %s173, 63
      %s178 = smul.addr %s175, 64
      %s179 = sadd.s32 %s177, %s178
      %s180 = smul.addr %s179, 8
      %s181 = scalar_lea.vmem %s2, %s180
      %s182 = smul.u32 32, %s17
      %v184 = vld [vmem:[%s171] sm:$0xf]
      %v185 = vld [vmem:[%s171 + $0x4] sm:$0xf]
      %v186 = vld [vmem:[%s171 + $0x8] sm:$0xf]
      %v187 = vld [vmem:[%s171 + $0xc] sm:$0xf]
      %v188 = vld [vmem:[%s171 + $0x10] sm:$0xf]
      %v189 = vld [vmem:[%s171 + $0x14] sm:$0xf]
      %v190 = vld [vmem:[%s171 + $0x18] sm:$0xf]
      %v191 = vld [vmem:[%s171 + $0x1c] sm:$0xf]
      %v192 = vld [vmem:[%s171 + $0x20] sm:$0xf]
      %v193 = vld [vmem:[%s171 + $0x24] sm:$0xf]
      %v194 = vld [vmem:[%s171 + $0x28] sm:$0xf]
      %v195 = vld [vmem:[%s171 + $0x2c] sm:$0xf]
      %v196 = vld [vmem:[%s171 + $0x30] sm:$0xf]
      %v197 = vld [vmem:[%s171 + $0x34] sm:$0xf]
      %v198 = vld [vmem:[%s171 + $0x38] sm:$0xf]
      %v199 = vld [vmem:[%s171 + $0x3c] sm:$0xf]
      %v200 = vld [vmem:[%s171 + $0x40] sm:$0xf]
      %v201 = vld [vmem:[%s171 + $0x44] sm:$0xf]
      %v202 = vld [vmem:[%s171 + $0x48] sm:$0xf]
      %v203 = vld [vmem:[%s171 + $0x4c] sm:$0xf]
      %v204 = vld [vmem:[%s171 + $0x50] sm:$0xf]
      %v205 = vld [vmem:[%s171 + $0x54] sm:$0xf]
      %v206 = vld [vmem:[%s171 + $0x58] sm:$0xf]
      %v207 = vld [vmem:[%s171 + $0x5c] sm:$0xf]
      %v208 = vld [vmem:[%s171 + $0x60] sm:$0xf]
      %v209 = vld [vmem:[%s171 + $0x64] sm:$0xf]
      %v210 = vld [vmem:[%s171 + $0x68] sm:$0xf]
      %v211 = vld [vmem:[%s171 + $0x6c] sm:$0xf]
      %v212 = vld [vmem:[%s171 + $0x70] sm:$0xf]
      %v213 = vld [vmem:[%s171 + $0x74] sm:$0xf]
      %v214 = vld [vmem:[%s171 + $0x78] sm:$0xf]
      %v215 = vld [vmem:[%s171 + $0x7c] sm:$0xf]
      %v216 = vld [vmem:[%s1] sm:$0xff]
      %v217 = vld [vmem:[%s1 + $0x8] sm:$0xff]
      %v218 = vld [vmem:[%s1 + $0x10] sm:$0xff]
      %v219 = vld [vmem:[%s1 + $0x18] sm:$0xff]
      %v220 = vld [vmem:[%s1 + $0x20] sm:$0xff]
      %v221 = vld [vmem:[%s1 + $0x28] sm:$0xff]
      %v222 = vld [vmem:[%s1 + $0x30] sm:$0xff]
      %v223 = vld [vmem:[%s1 + $0x38] sm:$0xff]
      %v224 = vld [vmem:[%s1 + $0x40] sm:$0xff]
      %v225 = vld [vmem:[%s1 + $0x48] sm:$0xff]
      %v226 = vld [vmem:[%s1 + $0x50] sm:$0xff]
      %v227 = vld [vmem:[%s1 + $0x58] sm:$0xff]
      %v228 = vld [vmem:[%s1 + $0x60] sm:$0xff]
      %v229 = vld [vmem:[%s1 + $0x68] sm:$0xff]
      %v230 = vld [vmem:[%s1 + $0x70] sm:$0xff]
      %v231 = vld [vmem:[%s1 + $0x78] sm:$0xff]
      %v264 = vunpack.c.l.b16 %v184
      %v265 = vunpack.c.l.b16 %v185
      %v266 = vunpack.c.l.b16 %v186
      %v267 = vunpack.c.l.b16 %v187
      %v268 = vunpack.c.l.b16 %v188
      %v269 = vunpack.c.l.b16 %v189
      %v270 = vunpack.c.l.b16 %v190
      %v271 = vunpack.c.l.b16 %v191
      %v272 = vunpack.c.l.b16 %v192
      %v273 = vunpack.c.l.b16 %v193
      %v274 = vunpack.c.l.b16 %v194
      %v275 = vunpack.c.l.b16 %v195
      %v276 = vunpack.c.l.b16 %v196
      %v277 = vunpack.c.l.b16 %v197
      %v278 = vunpack.c.l.b16 %v198
      %v279 = vunpack.c.l.b16 %v199
      %v280 = vunpack.c.l.b16 %v200
      %v281 = vunpack.c.l.b16 %v201
      %v282 = vunpack.c.l.b16 %v202
      %v283 = vunpack.c.l.b16 %v203
      %v284 = vunpack.c.l.b16 %v204
      %v285 = vunpack.c.l.b16 %v205
      %v286 = vunpack.c.l.b16 %v206
      %v287 = vunpack.c.l.b16 %v207
      %v288 = vunpack.c.l.b16 %v208
      %v289 = vunpack.c.l.b16 %v209
      %v290 = vunpack.c.l.b16 %v210
      %v291 = vunpack.c.l.b16 %v211
      %v292 = vunpack.c.l.b16 %v212
      %v293 = vunpack.c.l.b16 %v213
      %v294 = vunpack.c.l.b16 %v214
      %v295 = vunpack.c.l.b16 %v215
      %v296 = vpack.c.b16 %v265, %v264
      %v297 = vpack.c.b16 %v267, %v266
      %v298 = vpack.c.b16 %v269, %v268
      %v299 = vpack.c.b16 %v271, %v270
      %v300 = vpack.c.b16 %v273, %v272
      %v301 = vpack.c.b16 %v275, %v274
      %v302 = vpack.c.b16 %v277, %v276
      %v303 = vpack.c.b16 %v279, %v278
      %v304 = vpack.c.b16 %v281, %v280
      %v305 = vpack.c.b16 %v283, %v282
      %v306 = vpack.c.b16 %v285, %v284
      %v307 = vpack.c.b16 %v287, %v286
      %v308 = vpack.c.b16 %v289, %v288
      %v309 = vpack.c.b16 %v291, %v290
      %v310 = vpack.c.b16 %v293, %v292
      %v311 = vpack.c.b16 %v295, %v294
      %v344 = vunpack.c.l.b16 %v216
      %v345 = vunpack.c.h.b16 %v216
      %v346 = vunpack.c.l.b16 %v217
      %v347 = vunpack.c.h.b16 %v217
      %v348 = vunpack.c.l.b16 %v218
      %v349 = vunpack.c.h.b16 %v218
      %v350 = vunpack.c.l.b16 %v219
      %v351 = vunpack.c.h.b16 %v219
      %v352 = vunpack.c.l.b16 %v220
      %v353 = vunpack.c.h.b16 %v220
      %v354 = vunpack.c.l.b16 %v221
      %v355 = vunpack.c.h.b16 %v221
      %v356 = vunpack.c.l.b16 %v222
      %v357 = vunpack.c.h.b16 %v222
      %v358 = vunpack.c.l.b16 %v223
      %v359 = vunpack.c.h.b16 %v223
      %v360 = vunpack.c.l.b16 %v224
      %v361 = vunpack.c.h.b16 %v224
      %v362 = vunpack.c.l.b16 %v225
      %v363 = vunpack.c.h.b16 %v225
      %v364 = vunpack.c.l.b16 %v226
      %v365 = vunpack.c.h.b16 %v226
      %v366 = vunpack.c.l.b16 %v227
      %v367 = vunpack.c.h.b16 %v227
      %v368 = vunpack.c.l.b16 %v228
      %v369 = vunpack.c.h.b16 %v228
      %v370 = vunpack.c.l.b16 %v229
      %v371 = vunpack.c.h.b16 %v229
      %v372 = vunpack.c.l.b16 %v230
      %v373 = vunpack.c.h.b16 %v230
      %v374 = vunpack.c.l.b16 %v231
      %v375 = vunpack.c.h.b16 %v231
      %v376 = vpack.c.b16 %v346, %v344
      %v377 = vpack.c.b16 %v347, %v345
      %v378 = vpack.c.b16 %v350, %v348
      %v379 = vpack.c.b16 %v351, %v349
      %v380 = vpack.c.b16 %v354, %v352
      %v381 = vpack.c.b16 %v355, %v353
      %v382 = vpack.c.b16 %v358, %v356
      %v383 = vpack.c.b16 %v359, %v357
      %v384 = vpack.c.b16 %v362, %v360
      %v385 = vpack.c.b16 %v363, %v361
      %v386 = vpack.c.b16 %v366, %v364
      %v387 = vpack.c.b16 %v367, %v365
      %v388 = vpack.c.b16 %v370, %v368
      %v389 = vpack.c.b16 %v371, %v369
      %v390 = vpack.c.b16 %v374, %v372
      %v391 = vpack.c.b16 %v375, %v373
      %408 = vmatprep.subr.bf16.mxu0 %v391
      %409 = vmatpush1.bf16.msra.mxu0 %v390
      %410 = vmatprep.subr.bf16.mxu0 %v389
      %411 = vmatpush1.bf16.msra.mxu0 %v388
      %412 = vmatprep.subr.bf16.mxu0 %v387
      %413 = vmatpush1.bf16.msra.mxu0 %v386
      %414 = vmatprep.subr.bf16.mxu0 %v385
      %415 = vmatpush1.bf16.msra.mxu0 %v384
      %416 = vmatprep.subr.bf16.mxu0 %v383
      %417 = vmatpush1.bf16.msra.mxu0 %v382
      %418 = vmatprep.subr.bf16.mxu0 %v381
      %419 = vmatpush1.bf16.msra.mxu0 %v380
      %420 = vmatprep.subr.bf16.mxu0 %v379
      %421 = vmatpush1.bf16.msra.mxu0 %v378
      %422 = vmatprep.subr.bf16.mxu0 %v377
      %423 = vmatpush1.bf16.msra.mxu0 %v376
      %424 = vmatprep.subr.bf16.mxu0 0
      %425 = vmatpush2.bf16.msra.mxu0 0
      %426 = vmatprep.subr.bf16.mxu0 0
      %427 = vmatpush2.bf16.msra.mxu0 0
      %428 = vmatprep.subr.bf16.mxu0 0
      %429 = vmatpush2.bf16.msra.mxu0 0
      %430 = vmatprep.subr.bf16.mxu0 0
      %431 = vmatpush2.bf16.msra.mxu0 0
      %432 = vmatprep.subr.bf16.mxu0 0
      %433 = vmatpush2.bf16.msra.mxu0 0
      %434 = vmatprep.subr.bf16.mxu0 0
      %435 = vmatpush2.bf16.msra.mxu0 0
      %436 = vmatprep.subr.bf16.mxu0 0
      %437 = vmatpush2.bf16.msra.mxu0 0
      %438 = vmatprep.subr.bf16.mxu0 0
      %439 = vmatpush2.bf16.msra.mxu0 0
      %440 = vmatprep.mubr.bf16.mxu0 0
      %441 = vmatmul.mubr.bf16.gmra.mxu0 %v296
      %v442 = vpop.f32.mrf.mxu0
      %v443 = vadd.f32 0.0, %v442
      %v444 = vpop.f32.mrf.mxu0
      %v445 = vadd.f32 0.0, %v444
      %v446 = vpop.f32.mrf.mxu0
      %v447 = vadd.f32 0.0, %v446
      %v448 = vpop.f32.mrf.mxu0
      %v449 = vadd.f32 0.0, %v448
      %450 = vmatprep.mubr.bf16.mxu0 0
      %451 = vmatmul.mubr.bf16.gmra.mxu0 %v297
      %v452 = vpop.f32.mrf.mxu0
      %v453 = vadd.f32 0.0, %v452
      %v454 = vpop.f32.mrf.mxu0
      %v455 = vadd.f32 0.0, %v454
      %v456 = vpop.f32.mrf.mxu0
      %v457 = vadd.f32 0.0, %v456
      %v458 = vpop.f32.mrf.mxu0
      %v459 = vadd.f32 0.0, %v458
      %460 = vmatprep.mubr.bf16.mxu0 0
      %461 = vmatmul.mubr.bf16.gmra.mxu0 %v298
      %v462 = vpop.f32.mrf.mxu0
      %v463 = vadd.f32 0.0, %v462
      %v464 = vpop.f32.mrf.mxu0
      %v465 = vadd.f32 0.0, %v464
      %v466 = vpop.f32.mrf.mxu0
      %v467 = vadd.f32 0.0, %v466
      %v468 = vpop.f32.mrf.mxu0
      %v469 = vadd.f32 0.0, %v468
      %470 = vmatprep.mubr.bf16.mxu0 0
      %471 = vmatmul.mubr.bf16.gmra.mxu0 %v299
      %v472 = vpop.f32.mrf.mxu0
      %v473 = vadd.f32 0.0, %v472
      %v474 = vpop.f32.mrf.mxu0
      %v475 = vadd.f32 0.0, %v474
      %v476 = vpop.f32.mrf.mxu0
      %v477 = vadd.f32 0.0, %v476
      %v478 = vpop.f32.mrf.mxu0
      %v479 = vadd.f32 0.0, %v478
      %480 = vmatprep.mubr.bf16.mxu0 0
      %481 = vmatmul.mubr.bf16.gmra.mxu0 %v300
      %v482 = vpop.f32.mrf.mxu0
      %v483 = vadd.f32 0.0, %v482
      %v484 = vpop.f32.mrf.mxu0
      %v485 = vadd.f32 0.0, %v484
      %v486 = vpop.f32.mrf.mxu0
      %v487 = vadd.f32 0.0, %v486
      %v488 = vpop.f32.mrf.mxu0
      %v489 = vadd.f32 0.0, %v488
      %490 = vmatprep.mubr.bf16.mxu0 0
      %491 = vmatmul.mubr.bf16.gmra.mxu0 %v301
      %v492 = vpop.f32.mrf.mxu0
      %v493 = vadd.f32 0.0, %v492
      %v494 = vpop.f32.mrf.mxu0
      %v495 = vadd.f32 0.0, %v494
      %v496 = vpop.f32.mrf.mxu0
      %v497 = vadd.f32 0.0, %v496
      %v498 = vpop.f32.mrf.mxu0
      %v499 = vadd.f32 0.0, %v498
      %500 = vmatprep.mubr.bf16.mxu0 0
      %501 = vmatmul.mubr.bf16.gmra.mxu0 %v302
      %v502 = vpop.f32.mrf.mxu0
      %v503 = vadd.f32 0.0, %v502
      %v504 = vpop.f32.mrf.mxu0
      %v505 = vadd.f32 0.0, %v504
      %v506 = vpop.f32.mrf.mxu0
      %v507 = vadd.f32 0.0, %v506
      %v508 = vpop.f32.mrf.mxu0
      %v509 = vadd.f32 0.0, %v508
      %510 = vmatprep.mubr.bf16.mxu0 0
      %511 = vmatmul.mubr.bf16.gmra.mxu0 %v303
      %v512 = vpop.f32.mrf.mxu0
      %v513 = vadd.f32 0.0, %v512
      %v514 = vpop.f32.mrf.mxu0
      %v515 = vadd.f32 0.0, %v514
      %v516 = vpop.f32.mrf.mxu0
      %v517 = vadd.f32 0.0, %v516
      %v518 = vpop.f32.mrf.mxu0
      %v519 = vadd.f32 0.0, %v518
      %520 = vmatprep.mubr.bf16.mxu0 0
      %521 = vmatmul.mubr.bf16.gmra.mxu0 %v304
      %v522 = vpop.f32.mrf.mxu0
      %v523 = vadd.f32 0.0, %v522
      %v524 = vpop.f32.mrf.mxu0
      %v525 = vadd.f32 0.0, %v524
      %v526 = vpop.f32.mrf.mxu0
      %v527 = vadd.f32 0.0, %v526
      %v528 = vpop.f32.mrf.mxu0
      %v529 = vadd.f32 0.0, %v528
      %530 = vmatprep.mubr.bf16.mxu0 0
      %531 = vmatmul.mubr.bf16.gmra.mxu0 %v305
      %v532 = vpop.f32.mrf.mxu0
      %v533 = vadd.f32 0.0, %v532
      %v534 = vpop.f32.mrf.mxu0
      %v535 = vadd.f32 0.0, %v534
      %v536 = vpop.f32.mrf.mxu0
      %v537 = vadd.f32 0.0, %v536
      %v538 = vpop.f32.mrf.mxu0
      %v539 = vadd.f32 0.0, %v538
      %540 = vmatprep.mubr.bf16.mxu0 0
      %541 = vmatmul.mubr.bf16.gmra.mxu0 %v306
      %v542 = vpop.f32.mrf.mxu0
      %v543 = vadd.f32 0.0, %v542
      %v544 = vpop.f32.mrf.mxu0
      %v545 = vadd.f32 0.0, %v544
      %v546 = vpop.f32.mrf.mxu0
      %v547 = vadd.f32 0.0, %v546
      %v548 = vpop.f32.mrf.mxu0
      %v549 = vadd.f32 0.0, %v548
      %550 = vmatprep.mubr.bf16.mxu0 0
      %551 = vmatmul.mubr.bf16.gmra.mxu0 %v307
      %v552 = vpop.f32.mrf.mxu0
      %v553 = vadd.f32 0.0, %v552
      %v554 = vpop.f32.mrf.mxu0
      %v555 = vadd.f32 0.0, %v554
      %v556 = vpop.f32.mrf.mxu0
      %v557 = vadd.f32 0.0, %v556
      %v558 = vpop.f32.mrf.mxu0
      %v559 = vadd.f32 0.0, %v558
      %560 = vmatprep.mubr.bf16.mxu0 0
      %561 = vmatmul.mubr.bf16.gmra.mxu0 %v308
      %v562 = vpop.f32.mrf.mxu0
      %v563 = vadd.f32 0.0, %v562
      %v564 = vpop.f32.mrf.mxu0
      %v565 = vadd.f32 0.0, %v564
      %v566 = vpop.f32.mrf.mxu0
      %v567 = vadd.f32 0.0, %v566
      %v568 = vpop.f32.mrf.mxu0
      %v569 = vadd.f32 0.0, %v568
      %570 = vmatprep.mubr.bf16.mxu0 0
      %571 = vmatmul.mubr.bf16.gmra.mxu0 %v309
      %v572 = vpop.f32.mrf.mxu0
      %v573 = vadd.f32 0.0, %v572
      %v574 = vpop.f32.mrf.mxu0
      %v575 = vadd.f32 0.0, %v574
      %v576 = vpop.f32.mrf.mxu0
      %v577 = vadd.f32 0.0, %v576
      %v578 = vpop.f32.mrf.mxu0
      %v579 = vadd.f32 0.0, %v578
      %580 = vmatprep.mubr.bf16.mxu0 0
      %581 = vmatmul.mubr.bf16.gmra.mxu0 %v310
      %v582 = vpop.f32.mrf.mxu0
      %v583 = vadd.f32 0.0, %v582
      %v584 = vpop.f32.mrf.mxu0
      %v585 = vadd.f32 0.0, %v584
      %v586 = vpop.f32.mrf.mxu0
      %v587 = vadd.f32 0.0, %v586
      %v588 = vpop.f32.mrf.mxu0
      %v589 = vadd.f32 0.0, %v588
      %590 = vmatprep.mubr.bf16.mxu0 0
      %591 = vmatmul.mubr.bf16.gmra.mxu0 %v311
      %v592 = vpop.f32.mrf.mxu0
      %v593 = vadd.f32 0.0, %v592
      %v594 = vpop.f32.mrf.mxu0
      %v595 = vadd.f32 0.0, %v594
      %v596 = vpop.f32.mrf.mxu0
      %v597 = vadd.f32 0.0, %v596
      %v598 = vpop.f32.mrf.mxu0
      %v599 = vadd.f32 0.0, %v598
      %600 = vdwg.mxu0
      %v601 = vtanh.pop %v443
      %v602 = vtanh.pop %v447
      %v603 = vtanh.pop %v453
      %v604 = vtanh.pop %v457
      %v605 = vtanh.pop %v463
      %v606 = vtanh.pop %v467
      %v607 = vtanh.pop %v473
      %v608 = vtanh.pop %v477
      %v609 = vtanh.pop %v483
      %v610 = vtanh.pop %v487
      %v611 = vtanh.pop %v493
      %v612 = vtanh.pop %v497
      %v613 = vtanh.pop %v503
      %v614 = vtanh.pop %v507
      %v615 = vtanh.pop %v513
      %v616 = vtanh.pop %v517
      %v617 = vtanh.pop %v523
      %v618 = vtanh.pop %v527
      %v619 = vtanh.pop %v533
      %v620 = vtanh.pop %v537
      %v621 = vtanh.pop %v543
      %v622 = vtanh.pop %v547
      %v623 = vtanh.pop %v553
      %v624 = vtanh.pop %v557
      %v625 = vtanh.pop %v563
      %v626 = vtanh.pop %v567
      %v627 = vtanh.pop %v573
      %v628 = vtanh.pop %v577
      %v629 = vtanh.pop %v583
      %v630 = vtanh.pop %v587
      %v631 = vtanh.pop %v593
      %v632 = vtanh.pop %v597
      %v633 = vmul.f32 %v445, 0.5
      %v634 = vmul.f32 %v449, 0.5
      %v635 = vmul.f32 %v455, 0.5
      %v636 = vmul.f32 %v459, 0.5
      %v637 = vmul.f32 %v465, 0.5
      %v638 = vmul.f32 %v469, 0.5
      %v639 = vmul.f32 %v475, 0.5
      %v640 = vmul.f32 %v479, 0.5
      %v641 = vmul.f32 %v485, 0.5
      %v642 = vmul.f32 %v489, 0.5
      %v643 = vmul.f32 %v495, 0.5
      %v644 = vmul.f32 %v499, 0.5
      %v645 = vmul.f32 %v505, 0.5
      %v646 = vmul.f32 %v509, 0.5
      %v647 = vmul.f32 %v515, 0.5
      %v648 = vmul.f32 %v519, 0.5
      %v649 = vmul.f32 %v525, 0.5
      %v650 = vmul.f32 %v529, 0.5
      %v651 = vmul.f32 %v535, 0.5
      %v652 = vmul.f32 %v539, 0.5
      %v653 = vmul.f32 %v545, 0.5
      %v654 = vmul.f32 %v549, 0.5
      %v655 = vmul.f32 %v555, 0.5
      %v656 = vmul.f32 %v559, 0.5
      %v657 = vmul.f32 %v565, 0.5
      %v658 = vmul.f32 %v569, 0.5
      %v659 = vmul.f32 %v575, 0.5
      %v660 = vmul.f32 %v579, 0.5
      %v661 = vmul.f32 %v585, 0.5
      %v662 = vmul.f32 %v589, 0.5
      %v663 = vmul.f32 %v595, 0.5
      %v664 = vmul.f32 %v599, 0.5
      %v665 = vtanh.pop %v633
      %v666 = vtanh.pop %v634
      %v667 = vtanh.pop %v635
      %v668 = vtanh.pop %v636
      %v669 = vtanh.pop %v637
      %v670 = vtanh.pop %v638
      %v671 = vtanh.pop %v639
      %v672 = vtanh.pop %v640
      %v673 = vtanh.pop %v641
      %v674 = vtanh.pop %v642
      %v675 = vtanh.pop %v643
      %v676 = vtanh.pop %v644
      %v677 = vtanh.pop %v645
      %v678 = vtanh.pop %v646
      %v679 = vtanh.pop %v647
      %v680 = vtanh.pop %v648
      %v681 = vtanh.pop %v649
      %v682 = vtanh.pop %v650
      %v683 = vtanh.pop %v651
      %v684 = vtanh.pop %v652
      %v685 = vtanh.pop %v653
      %v686 = vtanh.pop %v654
      %v687 = vtanh.pop %v655
      %v688 = vtanh.pop %v656
      %v689 = vtanh.pop %v657
      %v690 = vtanh.pop %v658
      %v691 = vtanh.pop %v659
      %v692 = vtanh.pop %v660
      %v693 = vtanh.pop %v661
      %v694 = vtanh.pop %v662
      %v695 = vtanh.pop %v663
      %v696 = vtanh.pop %v664
      %v697 = vmul.f32 %v665, 0.5
      %v698 = vmul.f32 %v666, 0.5
      %v699 = vmul.f32 %v667, 0.5
      %v700 = vmul.f32 %v668, 0.5
      %v701 = vmul.f32 %v669, 0.5
      %v702 = vmul.f32 %v670, 0.5
      %v703 = vmul.f32 %v671, 0.5
      %v704 = vmul.f32 %v672, 0.5
      %v705 = vmul.f32 %v673, 0.5
      %v706 = vmul.f32 %v674, 0.5
      %v707 = vmul.f32 %v675, 0.5
      %v708 = vmul.f32 %v676, 0.5
      %v709 = vmul.f32 %v677, 0.5
      %v710 = vmul.f32 %v678, 0.5
      %v711 = vmul.f32 %v679, 0.5
      %v712 = vmul.f32 %v680, 0.5
      %v713 = vmul.f32 %v681, 0.5
      %v714 = vmul.f32 %v682, 0.5
      %v715 = vmul.f32 %v683, 0.5
      %v716 = vmul.f32 %v684, 0.5
      %v717 = vmul.f32 %v685, 0.5
      %v718 = vmul.f32 %v686, 0.5
      %v719 = vmul.f32 %v687, 0.5
      %v720 = vmul.f32 %v688, 0.5
      %v721 = vmul.f32 %v689, 0.5
      %v722 = vmul.f32 %v690, 0.5
      %v723 = vmul.f32 %v691, 0.5
      %v724 = vmul.f32 %v692, 0.5
      %v725 = vmul.f32 %v693, 0.5
      %v726 = vmul.f32 %v694, 0.5
      %v727 = vmul.f32 %v695, 0.5
      %v728 = vmul.f32 %v696, 0.5
      %v729 = vadd.f32 %v697, 0.5
      %v730 = vadd.f32 %v698, 0.5
      %v731 = vadd.f32 %v699, 0.5
      %v732 = vadd.f32 %v700, 0.5
      %v733 = vadd.f32 %v701, 0.5
      %v734 = vadd.f32 %v702, 0.5
      %v735 = vadd.f32 %v703, 0.5
      %v736 = vadd.f32 %v704, 0.5
      %v737 = vadd.f32 %v705, 0.5
      %v738 = vadd.f32 %v706, 0.5
      %v739 = vadd.f32 %v707, 0.5
      %v740 = vadd.f32 %v708, 0.5
      %v741 = vadd.f32 %v709, 0.5
      %v742 = vadd.f32 %v710, 0.5
      %v743 = vadd.f32 %v711, 0.5
      %v744 = vadd.f32 %v712, 0.5
      %v745 = vadd.f32 %v713, 0.5
      %v746 = vadd.f32 %v714, 0.5
      %v747 = vadd.f32 %v715, 0.5
      %v748 = vadd.f32 %v716, 0.5
      %v749 = vadd.f32 %v717, 0.5
      %v750 = vadd.f32 %v718, 0.5
      %v751 = vadd.f32 %v719, 0.5
      %v752 = vadd.f32 %v720, 0.5
      %v753 = vadd.f32 %v721, 0.5
      %v754 = vadd.f32 %v722, 0.5
      %v755 = vadd.f32 %v723, 0.5
      %v756 = vadd.f32 %v724, 0.5
      %v757 = vadd.f32 %v725, 0.5
      %v758 = vadd.f32 %v726, 0.5
      %v759 = vadd.f32 %v727, 0.5
      %v760 = vadd.f32 %v728, 0.5
      %p761 = scmp.eq.s32.totalorder %s18, 0
      // Predicated region
      $region29: #{_lambda_.1} parent=27 // pred_check
        %p762 = pneg %p761
      $region30: #{_lambda_.1} parent=27 // pred_check_branch
        %764 = sbr.rel (%p762) target = $region32
      $region31: #{_lambda_.1} parent=27 // pred_region
        %765 = vst [vmem:[#allocation2] sm:$0xff] 0.0
        %766 = vst [vmem:[#allocation2 + $0x8] sm:$0xff] 0.0
        %767 = vst [vmem:[#allocation2 + $0x10] sm:$0xff] 0.0
        %768 = vst [vmem:[#allocation2 + $0x18] sm:$0xff] 0.0
        %769 = vst [vmem:[#allocation2 + $0x20] sm:$0xff] 0.0
        %770 = vst [vmem:[#allocation2 + $0x28] sm:$0xff] 0.0
        %771 = vst [vmem:[#allocation2 + $0x30] sm:$0xff] 0.0
        %772 = vst [vmem:[#allocation2 + $0x38] sm:$0xff] 0.0
        %773 = vst [vmem:[#allocation2 + $0x40] sm:$0xff] 0.0
        %774 = vst [vmem:[#allocation2 + $0x48] sm:$0xff] 0.0
        %775 = vst [vmem:[#allocation2 + $0x50] sm:$0xff] 0.0
        %776 = vst [vmem:[#allocation2 + $0x58] sm:$0xff] 0.0
        %777 = vst [vmem:[#allocation2 + $0x60] sm:$0xff] 0.0
        %778 = vst [vmem:[#allocation2 + $0x68] sm:$0xff] 0.0
        %779 = vst [vmem:[#allocation2 + $0x70] sm:$0xff] 0.0
        %780 = vst [vmem:[#allocation2 + $0x78] sm:$0xff] 0.0
        %781 = vst [vmem:[#allocation2 + $0x80] sm:$0xff] 0.0
        %782 = vst [vmem:[#allocation2 + $0x88] sm:$0xff] 0.0
        %783 = vst [vmem:[#allocation2 + $0x90] sm:$0xff] 0.0
        %784 = vst [vmem:[#allocation2 + $0x98] sm:$0xff] 0.0
        %785 = vst [vmem:[#allocation2 + $0xa0] sm:$0xff] 0.0
        %786 = vst [vmem:[#allocation2 + $0xa8] sm:$0xff] 0.0
        %787 = vst [vmem:[#allocation2 + $0xb0] sm:$0xff] 0.0
        %788 = vst [vmem:[#allocation2 + $0xb8] sm:$0xff] 0.0
        %789 = vst [vmem:[#allocation2 + $0xc0] sm:$0xff] 0.0
        %790 = vst [vmem:[#allocation2 + $0xc8] sm:$0xff] 0.0
        %791 = vst [vmem:[#allocation2 + $0xd0] sm:$0xff] 0.0
        %792 = vst [vmem:[#allocation2 + $0xd8] sm:$0xff] 0.0
        %793 = vst [vmem:[#allocation2 + $0xe0] sm:$0xff] 0.0
        %794 = vst [vmem:[#allocation2 + $0xe8] sm:$0xff] 0.0
        %795 = vst [vmem:[#allocation2 + $0xf0] sm:$0xff] 0.0
        %796 = vst [vmem:[#allocation2 + $0xf8] sm:$0xff] 0.0
      $region32: #{_lambda_.1} parent=27 // pred_fallthru
        _
      %v797 = vld [vmem:[#allocation2] sm:$0xff]
      %v798 = vld [vmem:[#allocation2 + $0x8] sm:$0xff]
      %v799 = vld [vmem:[#allocation2 + $0x10] sm:$0xff]
      %v800 = vld [vmem:[#allocation2 + $0x18] sm:$0xff]
      %v801 = vld [vmem:[#allocation2 + $0x20] sm:$0xff]
      %v802 = vld [vmem:[#allocation2 + $0x28] sm:$0xff]
      %v803 = vld [vmem:[#allocation2 + $0x30] sm:$0xff]
      %v804 = vld [vmem:[#allocation2 + $0x38] sm:$0xff]
      %v805 = vld [vmem:[#allocation2 + $0x40] sm:$0xff]
      %v806 = vld [vmem:[#allocation2 + $0x48] sm:$0xff]
      %v807 = vld [vmem:[#allocation2 + $0x50] sm:$0xff]
      %v808 = vld [vmem:[#allocation2 + $0x58] sm:$0xff]
      %v809 = vld [vmem:[#allocation2 + $0x60] sm:$0xff]
      %v810 = vld [vmem:[#allocation2 + $0x68] sm:$0xff]
      %v811 = vld [vmem:[#allocation2 + $0x70] sm:$0xff]
      %v812 = vld [vmem:[#allocation2 + $0x78] sm:$0xff]
      %v813 = vld [vmem:[#allocation2 + $0x80] sm:$0xff]
      %v814 = vld [vmem:[#allocation2 + $0x88] sm:$0xff]
      %v815 = vld [vmem:[#allocation2 + $0x90] sm:$0xff]
      %v816 = vld [vmem:[#allocation2 + $0x98] sm:$0xff]
      %v817 = vld [vmem:[#allocation2 + $0xa0] sm:$0xff]
      %v818 = vld [vmem:[#allocation2 + $0xa8] sm:$0xff]
      %v819 = vld [vmem:[#allocation2 + $0xb0] sm:$0xff]
      %v820 = vld [vmem:[#allocation2 + $0xb8] sm:$0xff]
      %v821 = vld [vmem:[#allocation2 + $0xc0] sm:$0xff]
      %v822 = vld [vmem:[#allocation2 + $0xc8] sm:$0xff]
      %v823 = vld [vmem:[#allocation2 + $0xd0] sm:$0xff]
      %v824 = vld [vmem:[#allocation2 + $0xd8] sm:$0xff]
      %v825 = vld [vmem:[#allocation2 + $0xe0] sm:$0xff]
      %v826 = vld [vmem:[#allocation2 + $0xe8] sm:$0xff]
      %v827 = vld [vmem:[#allocation2 + $0xf0] sm:$0xff]
      %v828 = vld [vmem:[#allocation2 + $0xf8] sm:$0xff]
      %v829 = vmul.f32 %v729, %v797
      %v830 = vmul.f32 %v730, %v798
      %v831 = vmul.f32 %v731, %v799
      %v832 = vmul.f32 %v732, %v800
      %v833 = vmul.f32 %v733, %v801
      %v834 = vmul.f32 %v734, %v802
      %v835 = vmul.f32 %v735, %v803
      %v836 = vmul.f32 %v736, %v804
      %v837 = vmul.f32 %v737, %v805
      %v838 = vmul.f32 %v738, %v806
      %v839 = vmul.f32 %v739, %v807
      %v840 = vmul.f32 %v740, %v808
      %v841 = vmul.f32 %v741, %v809
      %v842 = vmul.f32 %v742, %v810
      %v843 = vmul.f32 %v743, %v811
      %v844 = vmul.f32 %v744, %v812
      %v845 = vmul.f32 %v745, %v813
      %v846 = vmul.f32 %v746, %v814
      %v847 = vmul.f32 %v747, %v815
      %v848 = vmul.f32 %v748, %v816
      %v849 = vmul.f32 %v749, %v817
      %v850 = vmul.f32 %v750, %v818
      %v851 = vmul.f32 %v751, %v819
      %v852 = vmul.f32 %v752, %v820
      %v853 = vmul.f32 %v753, %v821
      %v854 = vmul.f32 %v754, %v822
      %v855 = vmul.f32 %v755, %v823
      %v856 = vmul.f32 %v756, %v824
      %v857 = vmul.f32 %v757, %v825
      %v858 = vmul.f32 %v758, %v826
      %v859 = vmul.f32 %v759, %v827
      %v860 = vmul.f32 %v760, %v828
      %v861 = vsub.f32 1.0, %v729
      %v862 = vsub.f32 1.0, %v730
      %v863 = vsub.f32 1.0, %v731
      %v864 = vsub.f32 1.0, %v732
      %v865 = vsub.f32 1.0, %v733
      %v866 = vsub.f32 1.0, %v734
      %v867 = vsub.f32 1.0, %v735
      %v868 = vsub.f32 1.0, %v736
      %v869 = vsub.f32 1.0, %v737
      %v870 = vsub.f32 1.0, %v738
      %v871 = vsub.f32 1.0, %v739
      %v872 = vsub.f32 1.0, %v740
      %v873 = vsub.f32 1.0, %v741
      %v874 = vsub.f32 1.0, %v742
      %v875 = vsub.f32 1.0, %v743
      %v876 = vsub.f32 1.0, %v744
      %v877 = vsub.f32 1.0, %v745
      %v878 = vsub.f32 1.0, %v746
      %v879 = vsub.f32 1.0, %v747
      %v880 = vsub.f32 1.0, %v748
      %v881 = vsub.f32 1.0, %v749
      %v882 = vsub.f32 1.0, %v750
      %v883 = vsub.f32 1.0, %v751
      %v884 = vsub.f32 1.0, %v752
      %v885 = vsub.f32 1.0, %v753
      %v886 = vsub.f32 1.0, %v754
      %v887 = vsub.f32 1.0, %v755
      %v888 = vsub.f32 1.0, %v756
      %v889 = vsub.f32 1.0, %v757
      %v890 = vsub.f32 1.0, %v758
      %v891 = vsub.f32 1.0, %v759
      %v892 = vsub.f32 1.0, %v760
      %v893 = vmul.f32 %v861, %v601
      %v894 = vmul.f32 %v862, %v602
      %v895 = vmul.f32 %v863, %v603
      %v896 = vmul.f32 %v864, %v604
      %v897 = vmul.f32 %v865, %v605
      %v898 = vmul.f32 %v866, %v606
      %v899 = vmul.f32 %v867, %v607
      %v900 = vmul.f32 %v868, %v608
      %v901 = vmul.f32 %v869, %v609
      %v902 = vmul.f32 %v870, %v610
      %v903 = vmul.f32 %v871, %v611
      %v904 = vmul.f32 %v872, %v612
      %v905 = vmul.f32 %v873, %v613
      %v906 = vmul.f32 %v874, %v614
      %v907 = vmul.f32 %v875, %v615
      %v908 = vmul.f32 %v876, %v616
      %v909 = vmul.f32 %v877, %v617
      %v910 = vmul.f32 %v878, %v618
      %v911 = vmul.f32 %v879, %v619
      %v912 = vmul.f32 %v880, %v620
      %v913 = vmul.f32 %v881, %v621
      %v914 = vmul.f32 %v882, %v622
      %v915 = vmul.f32 %v883, %v623
      %v916 = vmul.f32 %v884, %v624
      %v917 = vmul.f32 %v885, %v625
      %v918 = vmul.f32 %v886, %v626
      %v919 = vmul.f32 %v887, %v627
      %v920 = vmul.f32 %v888, %v628
      %v921 = vmul.f32 %v889, %v629
      %v922 = vmul.f32 %v890, %v630
      %v923 = vmul.f32 %v891, %v631
      %v924 = vmul.f32 %v892, %v632
      %v925 = vadd.f32 %v829, %v893
      %v926 = vadd.f32 %v830, %v894
      %v927 = vadd.f32 %v831, %v895
      %v928 = vadd.f32 %v832, %v896
      %v929 = vadd.f32 %v833, %v897
      %v930 = vadd.f32 %v834, %v898
      %v931 = vadd.f32 %v835, %v899
      %v932 = vadd.f32 %v836, %v900
      %v933 = vadd.f32 %v837, %v901
      %v934 = vadd.f32 %v838, %v902
      %v935 = vadd.f32 %v839, %v903
      %v936 = vadd.f32 %v840, %v904
      %v937 = vadd.f32 %v841, %v905
      %v938 = vadd.f32 %v842, %v906
      %v939 = vadd.f32 %v843, %v907
      %v940 = vadd.f32 %v844, %v908
      %v941 = vadd.f32 %v845, %v909
      %v942 = vadd.f32 %v846, %v910
      %v943 = vadd.f32 %v847, %v911
      %v944 = vadd.f32 %v848, %v912
      %v945 = vadd.f32 %v849, %v913
      %v946 = vadd.f32 %v850, %v914
      %v947 = vadd.f32 %v851, %v915
      %v948 = vadd.f32 %v852, %v916
      %v949 = vadd.f32 %v853, %v917
      %v950 = vadd.f32 %v854, %v918
      %v951 = vadd.f32 %v855, %v919
      %v952 = vadd.f32 %v856, %v920
      %v953 = vadd.f32 %v857, %v921
      %v954 = vadd.f32 %v858, %v922
      %v955 = vadd.f32 %v859, %v923
      %v956 = vadd.f32 %v860, %v924
      %957 = vst [vmem:[#allocation2] sm:$0xff] %v925
      %958 = vst [vmem:[#allocation2 + $0x8] sm:$0xff] %v926
      %959 = vst [vmem:[#allocation2 + $0x10] sm:$0xff] %v927
      %960 = vst [vmem:[#allocation2 + $0x18] sm:$0xff] %v928
      %961 = vst [vmem:[#allocation2 + $0x20] sm:$0xff] %v929
      %962 = vst [vmem:[#allocation2 + $0x28] sm:$0xff] %v930
      %963 = vst [vmem:[#allocation2 + $0x30] sm:$0xff] %v931
      %964 = vst [vmem:[#allocation2 + $0x38] sm:$0xff] %v932
      %965 = vst [vmem:[#allocation2 + $0x40] sm:$0xff] %v933
      %966 = vst [vmem:[#allocation2 + $0x48] sm:$0xff] %v934
      %967 = vst [vmem:[#allocation2 + $0x50] sm:$0xff] %v935
      %968 = vst [vmem:[#allocation2 + $0x58] sm:$0xff] %v936
      %969 = vst [vmem:[#allocation2 + $0x60] sm:$0xff] %v937
      %970 = vst [vmem:[#allocation2 + $0x68] sm:$0xff] %v938
      %971 = vst [vmem:[#allocation2 + $0x70] sm:$0xff] %v939
      %972 = vst [vmem:[#allocation2 + $0x78] sm:$0xff] %v940
      %973 = vst [vmem:[#allocation2 + $0x80] sm:$0xff] %v941
      %974 = vst [vmem:[#allocation2 + $0x88] sm:$0xff] %v942
      %975 = vst [vmem:[#allocation2 + $0x90] sm:$0xff] %v943
      %976 = vst [vmem:[#allocation2 + $0x98] sm:$0xff] %v944
      %977 = vst [vmem:[#allocation2 + $0xa0] sm:$0xff] %v945
      %978 = vst [vmem:[#allocation2 + $0xa8] sm:$0xff] %v946
      %979 = vst [vmem:[#allocation2 + $0xb0] sm:$0xff] %v947
      %980 = vst [vmem:[#allocation2 + $0xb8] sm:$0xff] %v948
      %981 = vst [vmem:[#allocation2 + $0xc0] sm:$0xff] %v949
      %982 = vst [vmem:[#allocation2 + $0xc8] sm:$0xff] %v950
      %983 = vst [vmem:[#allocation2 + $0xd0] sm:$0xff] %v951
      %984 = vst [vmem:[#allocation2 + $0xd8] sm:$0xff] %v952
      %985 = vst [vmem:[#allocation2 + $0xe0] sm:$0xff] %v953
      %986 = vst [vmem:[#allocation2 + $0xe8] sm:$0xff] %v954
      %987 = vst [vmem:[#allocation2 + $0xf0] sm:$0xff] %v955
      %988 = vst [vmem:[#allocation2 + $0xf8] sm:$0xff] %v956
      %v989 = vld [vmem:[#allocation2] sm:$0xff]
      %v990 = vld [vmem:[#allocation2 + $0x8] sm:$0xff]
      %v991 = vld [vmem:[#allocation2 + $0x10] sm:$0xff]
      %v992 = vld [vmem:[#allocation2 + $0x18] sm:$0xff]
      %v993 = vld [vmem:[#allocation2 + $0x20] sm:$0xff]
      %v994 = vld [vmem:[#allocation2 + $0x28] sm:$0xff]
      %v995 = vld [vmem:[#allocation2 + $0x30] sm:$0xff]
      %v996 = vld [vmem:[#allocation2 + $0x38] sm:$0xff]
      %v997 = vld [vmem:[#allocation2 + $0x40] sm:$0xff]
      %v998 = vld [vmem:[#allocation2 + $0x48] sm:$0xff]
      %v999 = vld [vmem:[#allocation2 + $0x50] sm:$0xff]
      %v1000 = vld [vmem:[#allocation2 + $0x58] sm:$0xff]
      %v1001 = vld [vmem:[#allocation2 + $0x60] sm:$0xff]
      %v1002 = vld [vmem:[#allocation2 + $0x68] sm:$0xff]
      %v1003 = vld [vmem:[#allocation2 + $0x70] sm:$0xff]
      %v1004 = vld [vmem:[#allocation2 + $0x78] sm:$0xff]
      %v1005 = vld [vmem:[#allocation2 + $0x80] sm:$0xff]
      %v1006 = vld [vmem:[#allocation2 + $0x88] sm:$0xff]
      %v1007 = vld [vmem:[#allocation2 + $0x90] sm:$0xff]
      %v1008 = vld [vmem:[#allocation2 + $0x98] sm:$0xff]
      %v1009 = vld [vmem:[#allocation2 + $0xa0] sm:$0xff]
      %v1010 = vld [vmem:[#allocation2 + $0xa8] sm:$0xff]
      %v1011 = vld [vmem:[#allocation2 + $0xb0] sm:$0xff]
      %v1012 = vld [vmem:[#allocation2 + $0xb8] sm:$0xff]
      %v1013 = vld [vmem:[#allocation2 + $0xc0] sm:$0xff]
      %v1014 = vld [vmem:[#allocation2 + $0xc8] sm:$0xff]
      %v1015 = vld [vmem:[#allocation2 + $0xd0] sm:$0xff]
      %v1016 = vld [vmem:[#allocation2 + $0xd8] sm:$0xff]
      %v1017 = vld [vmem:[#allocation2 + $0xe0] sm:$0xff]
      %v1018 = vld [vmem:[#allocation2 + $0xe8] sm:$0xff]
      %v1019 = vld [vmem:[#allocation2 + $0xf0] sm:$0xff]
      %v1020 = vld [vmem:[#allocation2 + $0xf8] sm:$0xff]
      %vm1021 = vcmask 261120
      %1022 = vst.msk [vmem:[%s181] sm:$0xff] %vm1021, %v989
      %1023 = vst.msk [vmem:[%s181 + $0x8] sm:$0xff] %vm1021, %v990
      %1024 = vst.msk [vmem:[%s181 + $0x10] sm:$0xff] %vm1021, %v991
      %1025 = vst.msk [vmem:[%s181 + $0x18] sm:$0xff] %vm1021, %v992
      %1026 = vst.msk [vmem:[%s181 + $0x20] sm:$0xff] %vm1021, %v993
      %1027 = vst.msk [vmem:[%s181 + $0x28] sm:$0xff] %vm1021, %v994
      %1028 = vst.msk [vmem:[%s181 + $0x30] sm:$0xff] %vm1021, %v995
      %1029 = vst.msk [vmem:[%s181 + $0x38] sm:$0xff] %vm1021, %v996
      %1030 = vst.msk [vmem:[%s181 + $0x40] sm:$0xff] %vm1021, %v997
      %1031 = vst.msk [vmem:[%s181 + $0x48] sm:$0xff] %vm1021, %v998
      %1032 = vst.msk [vmem:[%s181 + $0x50] sm:$0xff] %vm1021, %v999
      %1033 = vst.msk [vmem:[%s181 + $0x58] sm:$0xff] %vm1021, %v1000
      %1034 = vst.msk [vmem:[%s181 + $0x60] sm:$0xff] %vm1021, %v1001
      %1035 = vst.msk [vmem:[%s181 + $0x68] sm:$0xff] %vm1021, %v1002
      %1036 = vst.msk [vmem:[%s181 + $0x70] sm:$0xff] %vm1021, %v1003
      %1037 = vst.msk [vmem:[%s181 + $0x78] sm:$0xff] %vm1021, %v1004
      %1038 = vst.msk [vmem:[%s181 + $0x80] sm:$0xff] %vm1021, %v1005
      %1039 = vst.msk [vmem:[%s181 + $0x88] sm:$0xff] %vm1021, %v1006
      %1040 = vst.msk [vmem:[%s181 + $0x90] sm:$0xff] %vm1021, %v1007
      %1041 = vst.msk [vmem:[%s181 + $0x98] sm:$0xff] %vm1021, %v1008
      %1042 = vst.msk [vmem:[%s181 + $0xa0] sm:$0xff] %vm1021, %v1009
      %1043 = vst.msk [vmem:[%s181 + $0xa8] sm:$0xff] %vm1021, %v1010
      %1044 = vst.msk [vmem:[%s181 + $0xb0] sm:$0xff] %vm1021, %v1011
      %1045 = vst.msk [vmem:[%s181 + $0xb8] sm:$0xff] %vm1021, %v1012
      %1046 = vst.msk [vmem:[%s181 + $0xc0] sm:$0xff] %vm1021, %v1013
      %1047 = vst.msk [vmem:[%s181 + $0xc8] sm:$0xff] %vm1021, %v1014
      %1048 = vst.msk [vmem:[%s181 + $0xd0] sm:$0xff] %vm1021, %v1015
      %1049 = vst.msk [vmem:[%s181 + $0xd8] sm:$0xff] %vm1021, %v1016
      %1050 = vst.msk [vmem:[%s181 + $0xe0] sm:$0xff] %vm1021, %v1017
      %1051 = vst.msk [vmem:[%s181 + $0xe8] sm:$0xff] %vm1021, %v1018
      %1052 = vst.msk [vmem:[%s181 + $0xf0] sm:$0xff] %vm1021, %v1019
      %1053 = vst.msk [vmem:[%s181 + $0xf8] sm:$0xff] %vm1021, %v1020
      %s1054 = smul.u32 32, %s17
      %p1055 = scmp.lt.s32.totalorder %s18, 7
      %s1056 = scalar_select %p1055, %s18, 7
      %p1057 = scmp.lt.s32.totalorder %s1054, 63
      %s1058 = scalar_select %p1057, %s1054, 63
      %s1059 = smul.addr %s1056, 64
      %s1060 = sadd.s32 %s1058, %s1059
      %s1061 = smul.addr %s1060, 8
      %s1062 = scalar_lea.vmem %s2, %s1061
      // Predicated region
      $region33: #{_lambda_.1} parent=27 // pred_check
        %p1063 = pneg %p94
      $region34: #{_lambda_.1} parent=27 // pred_check_branch
        %1065 = sbr.rel (%p1063) target = $region36
      $region35: #{_lambda_.1} parent=27 // pred_region
        %s1066 = smul.u32 32, %s17
      $region36: #{_lambda_.1} parent=27 // pred_fallthru
        _
    $region28: #{_lambda_.1} parent=5 // pred_fallthru
      _
    %p1067 = scmp.le.s32.totalorder 2, %s8
    // Predicated region
    $region37: #{_lambda_.1} parent=5 // pred_check
      %p1068 = pneg %p1067
    $region38: #{_lambda_.1} parent=5 // pred_check_branch
      %1070 = sbr.rel (%p1068) target = $region40
    $region39: #{_lambda_.1} parent=5 // pred_region
      %s1071 = ssub.s32 %s8, 2
      // Predicated region
      $region41: #{_lambda_.1} parent=39 // pred_check
        %p1072 = pneg %p100
      $region42: #{_lambda_.1} parent=39 // pred_check_branch
        %1074 = sbr.rel (%p1072) target = $region44
      $region43: #{_lambda_.1} parent=39 // pred_region
        %s1075 = smul.u32 32, %s19
        %p1076 = scmp.lt.s32.totalorder %s20, 7
        %s1077 = scalar_select %p1076, %s20, 7
        %p1078 = scmp.lt.s32.totalorder %s1075, 63
        %s1079 = scalar_select %p1078, %s1075, 63
        %s1080 = smul.addr %s1077, 64
        %s1081 = sadd.s32 %s1079, %s1080
        %s1082 = smul.addr %s1081, 8
        %s1083 = scalar_lea.vmem %s2, %s1082
      $region44: #{_lambda_.1} parent=39 // pred_fallthru
        _
    $region40: #{_lambda_.1} parent=5 // pred_fallthru
      _
  $region6: #{_lambda_.1} parent=0 // loop_footer
    %s12 = sadd.s32 1, %s8
  $region7: #{_lambda_.1} parent=0 // loop_footer_branch
    %7 = sbr.rel target = $region3
  $region8: #{_lambda_.1} parent=0 // loop_exit
    _

</llo_original>
